<compile_context>
chip_gen: v5e
topology: v5e:2x2
jax: 0.10.0
libtpu: 0.0.40
codegen_flags: <defaults>
</compile_context>

<pallas_src>
import jax
import jax.numpy as jnp
from jax.experimental import pallas as pl
from jax.experimental.pallas import tpu as pltpu


def _round_up(n, m):
    return ((n + m - 1) // m) * m


def housefit_kernel(x_ref, w1_ref, b1_ref, w2_ref, b2_ref, o_ref):
    # x_ref:  (16, TB)  feature-major, lane-dense batch tile
    # w1_ref: (4, 16)   PyTorch (out,in) layout -> exactly W1 for W1 @ x
    # b1_ref: (4, 1)    broadcasts over TB lanes
    # w2_ref: (4, 1), b2_ref: (1, 1)
    # o_ref:  (1, TB)   lane-dense output block
    h = jnp.dot(w1_ref[...], x_ref[...], preferred_element_type=jnp.float32)  # (4, TB) MXU
    h = jax.nn.sigmoid(h + b1_ref[...])                                       # VPU + EUP
    # Second Linear as a VPU weighted sum of 4 lane-dense rows (no K=4/N=1 MXU op).
    out = (b2_ref[...]
           + w2_ref[0:1, :] * h[0:1, :]
           + w2_ref[1:2, :] * h[1:2, :]
           + w2_ref[2:3, :] * h[2:3, :]
           + w2_ref[3:4, :] * h[3:4, :])                                      # (1, TB)
    o_ref[...] = out.astype(o_ref.dtype)


def housefit_forward(x, w1, b1, w2, b2, *, tb=2048):
    """x: (B,16) f32; w1: (4,16); b1: (4,1); w2: (4,1); b2: (1,1) -> (B,1)."""
    B = x.shape[0]
    # Pick a lane-aligned batch tile and pad B up to a multiple of it.
    b_min = _round_up(max(B, 1), 128)
    tb = max(128, min(_round_up(tb, 128), b_min))
    b_pad = _round_up(B, tb)
    grid = (b_pad // tb,)

    # Layout plumbing: feature-major (16, B_pad), zero-padded tail columns.
    x_t = jnp.zeros((16, b_pad), x.dtype).at[:, :B].set(x.T)

    out_t = pl.pallas_call(
        housefit_kernel,
        out_shape=jax.ShapeDtypeStruct((1, b_pad), jnp.float32),
        grid_spec=pltpu.PrefetchScalarGridSpec(
            num_scalar_prefetch=0,
            grid=grid,
            in_specs=[
                pl.BlockSpec((16, tb), lambda i: (0, i)),   # x tile (pipelined)
                pl.BlockSpec((4, 16), lambda i: (0, 0)),    # w1 (resident)
                pl.BlockSpec((4, 1), lambda i: (0, 0)),     # b1 (resident)
                pl.BlockSpec((4, 1), lambda i: (0, 0)),     # w2 (resident)
                pl.BlockSpec((1, 1), lambda i: (0, 0)),     # b2 (resident)
            ],
            out_specs=pl.BlockSpec((1, tb), lambda i: (0, i)),
        ),
        compiler_params=pltpu.CompilerParams(
            dimension_semantics=("parallel",),
        ),
    )(x_t, w1, b1, w2, b2)

    # (1, B_pad) -> (B_pad, 1) is the same contiguous bytes (free reshape).
    return out_t.reshape(b_pad, 1)[:B]


def init_params(key):
    """Deterministic init mirroring nn.Linear default (uniform +-1/sqrt(fan_in))."""
    k1, k2, k3, k4 = jax.random.split(key, 4)
    lim1 = 1.0 / jnp.sqrt(16.0)
    lim2 = 1.0 / jnp.sqrt(4.0)
    w1 = jax.random.uniform(k1, (4, 16), jnp.float32, -lim1, lim1)  # torch (out,in)
    b1 = jax.random.uniform(k2, (4, 1), jnp.float32, -lim1, lim1)   # column vector
    w2 = jax.random.uniform(k3, (4, 1), jnp.float32, -lim2, lim2)   # torch (1,4) transposed
    b2 = jax.random.uniform(k4, (1, 1), jnp.float32, -lim2, lim2)
    return w1, b1, w2, b2


def reference_forward(x, w1, b1, w2, b2):
    h = jax.nn.sigmoid(x @ w1.T + b1.T)   # (B,4)
    return h @ w2 + b2                    # (B,1)


if __name__ == "__main__":
    key = jax.random.PRNGKey(0)
    kx, kp, kx2 = jax.random.split(key, 3)

    w1, b1, w2, b2 = init_params(kp)

    # Small primary check (single grid step).
    B = 8
    x = jax.random.normal(kx, (B, 16), jnp.float32)
    out = jax.block_until_ready(housefit_forward(x, w1, b1, w2, b2))
    ref = reference_forward(x, w1, b1, w2, b2)
    assert out.shape == (B, 1), out.shape
    assert jnp.allclose(out, ref, atol=1e-5, rtol=1e-5), "mismatch vs reference (B=8)"

    # Multi-step grid + padded tail check (B=260 -> 3 tiles of 128).
    B2 = 260
    x2 = jax.random.normal(kx2, (B2, 16), jnp.float32)
    out2 = jax.block_until_ready(housefit_forward(x2, w1, b1, w2, b2, tb=128))
    ref2 = reference_forward(x2, w1, b1, w2, b2)
    assert out2.shape == (B2, 1), out2.shape
    assert jnp.allclose(out2, ref2, atol=1e-5, rtol=1e-5), "mismatch vs reference (B=260)"

    print("KERNEL_OK")
</pallas_src>

<mosaic_0001>
module attributes {stable_mosaic.version = 11 : i64} {
  func.func @housefit_kernel(%arg0: i32, %arg1: memref<16x128xf32, #tpu.memory_space<vmem>>, %arg2: memref<4x16xf32, #tpu.memory_space<vmem>>, %arg3: memref<4x1xf32, #tpu.memory_space<vmem>>, %arg4: memref<4x1xf32, #tpu.memory_space<vmem>>, %arg5: memref<1x1xf32, #tpu.memory_space<vmem>>, %arg6: memref<1x128xf32, #tpu.memory_space<vmem>>) attributes {dimension_semantics = [#tpu.dimension_semantics<parallel>], iteration_bounds = array<i64: 1>, scalar_prefetch = 0 : i64, scratch_operands = 0 : i64, tpu.core_type = #tpu.core_type<tc>, window_params = [{transform_indices = @transform_0, window_bounds = array<i64: 16, 128>}, {pipeline_mode = #tpu.pipeline_mode<synchronous>, transform_indices = @transform_1, window_bounds = array<i64: 4, 16>}, {pipeline_mode = #tpu.pipeline_mode<synchronous>, transform_indices = @transform_2, window_bounds = array<i64: 4, 1>}, {pipeline_mode = #tpu.pipeline_mode<synchronous>, transform_indices = @transform_3, window_bounds = array<i64: 4, 1>}, {pipeline_mode = #tpu.pipeline_mode<synchronous>, transform_indices = @transform_4, window_bounds = array<i64: 1, 1>}, {transform_indices = @transform_5, window_bounds = array<i64: 1, 128>}]} {
    %c0 = arith.constant 0 : index
    %c0_0 = arith.constant 0 : index
    %0 = vector.load %arg2[%c0, %c0_0] : memref<4x16xf32, #tpu.memory_space<vmem>>, vector<4x16xf32>
    %c0_1 = arith.constant 0 : index
    %c0_2 = arith.constant 0 : index
    %1 = vector.load %arg1[%c0_1, %c0_2] : memref<16x128xf32, #tpu.memory_space<vmem>>, vector<16x128xf32>
    %cst = arith.constant dense<0.000000e+00> : vector<4x128xf32>
    %2 = tpu.matmul %0, %1, %cst {dimension_numbers = #tpu.dot_dimension_numbers<[1], [0], [0], [1], [0, 0, 1, 1], [], []>} : vector<4x16xf32>, vector<16x128xf32>, vector<4x128xf32> -> vector<4x128xf32>
    %c0_3 = arith.constant 0 : index
    %c0_4 = arith.constant 0 : index
    %3 = vector.load %arg3[%c0_3, %c0_4] : memref<4x1xf32, #tpu.memory_space<vmem>>, vector<4x1xf32>
    %4 = vector.broadcast %3 : vector<4x1xf32> to vector<4x128xf32>
    %5 = arith.addf %2, %4 : vector<4x128xf32>
    %6 = arith.negf %5 : vector<4x128xf32>
    %7 = math.exp %6 : vector<4x128xf32>
    %cst_5 = arith.constant 1.000000e+00 : f32
    %8 = vector.broadcast %cst_5 : f32 to vector<4x128xf32>
    %9 = arith.addf %8, %7 : vector<4x128xf32>
    %10 = arith.divf %8, %9 : vector<4x128xf32>
    %c0_6 = arith.constant 0 : index
    %c0_7 = arith.constant 0 : index
    %11 = vector.load %arg5[%c0_6, %c0_7] : memref<1x1xf32, #tpu.memory_space<vmem>>, vector<1x1xf32>
    %c0_8 = arith.constant 0 : index
    %c0_9 = arith.constant 0 : index
    %12 = vector.load %arg4[%c0_8, %c0_9] : memref<4x1xf32, #tpu.memory_space<vmem>>, vector<1x1xf32>
    %13 = vector.extract_strided_slice %10 {offsets = [0, 0], sizes = [1, 128], strides = [1, 1]} : vector<4x128xf32> to vector<1x128xf32>
    %14 = vector.broadcast %12 : vector<1x1xf32> to vector<1x128xf32>
    %15 = arith.mulf %14, %13 : vector<1x128xf32>
    %16 = vector.broadcast %11 : vector<1x1xf32> to vector<1x128xf32>
    %17 = arith.addf %16, %15 : vector<1x128xf32>
    %c1 = arith.constant 1 : index
    %c0_10 = arith.constant 0 : index
    %18 = vector.load %arg4[%c1, %c0_10] : memref<4x1xf32, #tpu.memory_space<vmem>>, vector<1x1xf32>
    %19 = vector.extract_strided_slice %10 {offsets = [1, 0], sizes = [1, 128], strides = [1, 1]} : vector<4x128xf32> to vector<1x128xf32>
    %20 = vector.broadcast %18 : vector<1x1xf32> to vector<1x128xf32>
    %21 = arith.mulf %20, %19 : vector<1x128xf32>
    %22 = arith.addf %17, %21 : vector<1x128xf32>
    %c2 = arith.constant 2 : index
    %c0_11 = arith.constant 0 : index
    %23 = vector.load %arg4[%c2, %c0_11] : memref<4x1xf32, #tpu.memory_space<vmem>>, vector<1x1xf32>
    %24 = vector.extract_strided_slice %10 {offsets = [2, 0], sizes = [1, 128], strides = [1, 1]} : vector<4x128xf32> to vector<1x128xf32>
    %25 = vector.broadcast %23 : vector<1x1xf32> to vector<1x128xf32>
    %26 = arith.mulf %25, %24 : vector<1x128xf32>
    %27 = arith.addf %22, %26 : vector<1x128xf32>
    %c3 = arith.constant 3 : index
    %c0_12 = arith.constant 0 : index
    %28 = vector.load %arg4[%c3, %c0_12] : memref<4x1xf32, #tpu.memory_space<vmem>>, vector<1x1xf32>
    %29 = vector.extract_strided_slice %10 {offsets = [3, 0], sizes = [1, 128], strides = [1, 1]} : vector<4x128xf32> to vector<1x128xf32>
    %30 = vector.broadcast %28 : vector<1x1xf32> to vector<1x128xf32>
    %31 = arith.mulf %30, %29 : vector<1x128xf32>
    %32 = arith.addf %27, %31 : vector<1x128xf32>
    %c0_13 = arith.constant 0 : index
    %c0_14 = arith.constant 0 : index
    %33 = vector.load %arg6[%c0_13, %c0_14] : memref<1x128xf32, #tpu.memory_space<vmem>>, vector<1x128xf32>
    tpu.vector_store %arg6[%c0_13, %c0_14], %32 {strides = array<i32>} : memref<1x128xf32, #tpu.memory_space<vmem>>, vector<1x128xf32>,
    return
  }
  func.func @transform_0(%arg0: i32) -> (i32, i32) {
    %c0_i32 = arith.constant 0 : i32
    %c0_i32_0 = arith.constant 0 : i32
    return %c0_i32, %arg0 : i32, i32
  }
  func.func @transform_1(%arg0: i32) -> (i32, i32) {
    %c0_i32 = arith.constant 0 : i32
    %c0_i32_0 = arith.constant 0 : i32
    %c0_i32_1 = arith.constant 0 : i32
    return %c0_i32, %c0_i32_0 : i32, i32
  }
  func.func @transform_2(%arg0: i32) -> (i32, i32) {
    %c0_i32 = arith.constant 0 : i32
    %c0_i32_0 = arith.constant 0 : i32
    %c0_i32_1 = arith.constant 0 : i32
    return %c0_i32, %c0_i32_0 : i32, i32
  }
  func.func @transform_3(%arg0: i32) -> (i32, i32) {
    %c0_i32 = arith.constant 0 : i32
    %c0_i32_0 = arith.constant 0 : i32
    %c0_i32_1 = arith.constant 0 : i32
    return %c0_i32, %c0_i32_0 : i32, i32
  }
  func.func @transform_4(%arg0: i32) -> (i32, i32) {
    %c0_i32 = arith.constant 0 : i32
    %c0_i32_0 = arith.constant 0 : i32
    %c0_i32_1 = arith.constant 0 : i32
    return %c0_i32, %c0_i32_0 : i32, i32
  }
  func.func @transform_5(%arg0: i32) -> (i32, i32) {
    %c0_i32 = arith.constant 0 : i32
    %c0_i32_0 = arith.constant 0 : i32
    return %c0_i32, %arg0 : i32, i32
  }
}

</mosaic_0001>

<llo_original>
// kernel: tpu_custom_call.1
$region0: #{tpu_custom_call.1}
  #allocation0 [shape = 'u32[]', space=smem, size = 0x4, offset = 0x4, fixed_abs, tag = 'smem constant byte address 0x4 - core index']
  #allocation1 [shape = 'u32[72,128]{1,0:T(1,128)}', space=vmem, size = 0x9000, scoped, tag = 'internal scratch']
  #allocation2 [shape = 'f32[1,1]{1,0:T(1,128)S(1)}', space=vmem, size = 0x200, scoped, tag = 'scoped memory for tpu_custom_call.1']
  %s0 = inlined_call_operand.hbm [shape: f32[16,128], index: 0, kind: input, shape index: {}]
  %s1 = inlined_call_operand.vmem [shape: f32[4,16], index: 1, kind: input, shape index: {}]
  %s2 = inlined_call_operand.vmem [shape: f32[4,1], index: 2, kind: input, shape index: {}]
  %s3 = inlined_call_operand.vmem [shape: f32[4,1], index: 3, kind: input, shape index: {}]
  %s4 = inlined_call_operand.<no memory space> [shape: f32[1,1], index: 4, kind: input, shape index: {}]
  %s5 = inlined_call_operand.hbm [shape: f32[1,128], index: 5, kind: output, shape index: {}]
  %s6 = sld [smem:[#allocation0]]
  $region34: #{tpu_custom_call.1} parent=0
    _
  %s8 = ssub.s32 1, %s6
  %s9 = scalar_select 0, %s8, %s6
  %v10 = vstv %s4
  %11 = vst [vmem:[#allocation2] sm:$0x1] %v10
  $region1: #{tpu_custom_call.1} parent=0
    #allocation3 [shape = 'u8[8192]{0}', space=vmem, size = 0x2000, scoped, tag = 'input window, operand 0, single buffered']
    #allocation4 [shape = 's32[1]{0}', space=sflag, size = 0x4, scoped, tag = 'scoped memory for tpu_custom_call.1']
    #allocation5 [shape = 's32[1]{0}', space=sflag, size = 0x4, scoped, tag = 'scoped memory for tpu_custom_call.1']
    #allocation6 [shape = 'u8[512]{0}', space=vmem, size = 0x400, scoped, tag = 'output window, operand 0, single buffered']
    %12 = vsyncpa [#allocation4], 0
    %13 = vsyncpa [#allocation5], 0
    // Predicated region
    $region2: #{tpu_custom_call.1} parent=1 // pred_check
      _
    $region3: #{tpu_custom_call.1} parent=1 // pred_check_branch
      %15 = sbr.rel (0) target = $region5
    $region4: #{tpu_custom_call.1} parent=1 // pred_region
      %17 = vsyncadd [#allocation4], 0
      %s18 = sshll.u32 %s0, 4
      %s19 = int_to_ptr.hbm [resolvable:$true] %s18
      %s20 = sshll.u32 [#allocation3], 4
      %s21 = int_to_ptr.vmem [resolvable:$true] %s20
      %26 = dma.hbm_to_vmem [thread:$0]  %s19, 256, %s21, [#allocation4], 128, 128, 8
    $region5: #{tpu_custom_call.1} parent=1 // pred_fallthru
      _
    // Predicated region
    $region6: #{tpu_custom_call.1} parent=1 // pred_check
      _
    $region7: #{tpu_custom_call.1} parent=1 // pred_check_branch
      %28 = sbr.rel (0) target = $region9
    $region8: #{tpu_custom_call.1} parent=1 // pred_region
      _
    $region9: #{tpu_custom_call.1} parent=1 // pred_fallthru
      _
    // Predicated region
    $region10: #{tpu_custom_call.1} parent=1 // pred_check
      _
    $region11: #{tpu_custom_call.1} parent=1 // pred_check_branch
      %30 = sbr.rel (0) target = $region13
    $region12: #{tpu_custom_call.1} parent=1 // pred_region
      _
    $region13: #{tpu_custom_call.1} parent=1 // pred_fallthru
      _
    // Predicated region
    $region14: #{tpu_custom_call.1} parent=1 // pred_check
      _
    $region15: #{tpu_custom_call.1} parent=1 // pred_check_branch
      %32 = sbr.rel (0) target = $region17
    $region16: #{tpu_custom_call.1} parent=1 // pred_region
      _
    $region17: #{tpu_custom_call.1} parent=1 // pred_fallthru
      _
    // Predicated region
    $region18: #{tpu_custom_call.1} parent=1 // pred_check
      _
    $region19: #{tpu_custom_call.1} parent=1 // pred_check_branch
      %34 = sbr.rel (0) target = $region21
    $region20: #{tpu_custom_call.1} parent=1 // pred_region
      _
    $region21: #{tpu_custom_call.1} parent=1 // pred_fallthru
      _
    // Predicated region
    $region22: #{tpu_custom_call.1} parent=1 // pred_check
      _
    $region23: #{tpu_custom_call.1} parent=1 // pred_check_branch
      %36 = sbr.rel (0) target = $region25
    $region24: #{tpu_custom_call.1} parent=1 // pred_region
      %38 = dma.done [#allocation4], 256
    $region25: #{tpu_custom_call.1} parent=1 // pred_fallthru
      _
    %v39 = vld [vmem:[%s1] sm:$0xf]
    %v40 = vld [vmem:[#allocation3] sm:$0xff]
    %v41 = vld [vmem:[#allocation3 + $0x8] sm:$0xff]
    %v42 = vld [vmem:[%s2] sm:$0xf]
    %44 = vset.pattern.permute.xlu0 0
    %45 = vperm.xlu0 %44, %v42
    %v46 = vpop.permute.xlu0 %45
    %vm48 = vcmask 130048
    %v50 = vsel %vm48, %v39, 0
    %52 = vmatpush.msra.mxu0 0.0
    %53 = vmatpush.msra.mxu0 0.0
    %54 = vmatpush.msra.mxu0 0.0
    %55 = vmatpush.msra.mxu0 0.0
    %56 = vmatpush.msra.mxu0 0.0
    %57 = vmatpush.msra.mxu0 0.0
    %58 = vmatpush.msra.mxu0 0.0
    %59 = vmatpush.msra.mxu0 0.0
    %60 = vmatpush.msra.mxu0 0.0
    %61 = vmatpush.msra.mxu0 0.0
    %62 = vmatpush.msra.mxu0 0.0
    %63 = vmatpush.msra.mxu0 0.0
    %64 = vmatpush.msra.mxu0 0.0
    %65 = vmatpush.msra.mxu0 0.0
    %66 = vmatpush.msra.mxu0 %v41
    %67 = vmatpush.msra.mxu0 %v40
    %68 = vmatmul.f32.gmra.mxu0 %v50
    %v69 = vpop.f32.mrf.mxu0
    %v70 = vadd.f32 %v46, %v69
    %71 = vdwg.mxu0
    %v72 = vxor.u32 %v70, 2147483648
    %v73 = vmul.f32 %v72, 1.442695
    %v74 = vpow.pop %v73
    %v75 = vadd.f32 %v74, 1.0
    %v76 = vrcp.pop %v75
    %v77 = vmul.f32 %v75, %v76
    %v78 = vsub.f32 1.0, %v77
    %v79 = vmul.f32 %v76, %v78
    %v80 = vadd.f32 %v76, %v79
    %vm81 = vweird.f32 %v75
    %vm82 = vweird.f32 %v76
    %vm83 = vmor %vm81, %vm82
    %v84 = vsel %vm83, %v76, %v80
    %v85 = vand.u32 2147483647, %v75
    %vm86 = vcmp.eq.f32.partialorder %v85, 8.507059e+37
    %v87 = vand.u32 %v75, 2147483648
    %v88 = vor.u32 1.1754944e-38, %v87
    %v89 = vsel %vm86, %v88, %v84
    %v90 = vmul.f32 1.0, %v89
    %v91 = vld [vmem:[#allocation2] sm:$0x1]
    %v92 = vld [vmem:[%s3] sm:$0x1]
    %94 = vset.pattern.permute.xlu0 0
    %95 = vperm.xlu0 %94, %v92
    %v96 = vpop.permute.xlu0 %95
    %v98 = vmul.f32 %v96, %v90
    %100 = vset.pattern.permute.xlu0 0
    %101 = vperm.xlu0 %100, %v91
    %v102 = vpop.permute.xlu0 %101
    %v104 = vperm.slane %v102, 0
    %v105 = vadd.f32 %v104, %v98
    %v106 = vld [vmem:[%s3 + $0x1] sm:$0x1]
    %108 = vset.pattern.permute.xlu0 0
    %109 = vperm.xlu0 %108, %v106
    %v110 = vpop.permute.xlu0 %109
    %v113 = vrot.slane %v90, 1
    %v115 = vmul.f32 %v110, %v113
    %v116 = vadd.f32 %v105, %v115
    %v117 = vld [vmem:[%s3 + $0x2] sm:$0x1]
    %119 = vset.pattern.permute.xlu0 0
    %120 = vperm.xlu0 %119, %v117
    %v121 = vpop.permute.xlu0 %120
    %v123 = vrot.slane %v90, 2
    %v125 = vmul.f32 %v121, %v123
    %v126 = vadd.f32 %v116, %v125
    %v127 = vld [vmem:[%s3 + $0x3] sm:$0x1]
    %129 = vset.pattern.permute.xlu0 0
    %130 = vperm.xlu0 %129, %v127
    %v131 = vpop.permute.xlu0 %130
    %v133 = vrot.slane %v90, 3
    %v135 = vmul.f32 %v131, %v133
    %v136 = vadd.f32 %v126, %v135
    %137 = vst [vmem:[#allocation6] sm:$0x1] %v136
    // Predicated region
    $region26: #{tpu_custom_call.1} parent=1 // pred_check
      _
    $region27: #{tpu_custom_call.1} parent=1 // pred_check_branch
      %139 = sbr.rel (0) target = $region29
    $region28: #{tpu_custom_call.1} parent=1 // pred_region
      %141 = vsyncadd [#allocation5], 0
      %s143 = sshll.u32 [#allocation6], 4
      %s144 = int_to_ptr.vmem [resolvable:$true] %s143
      %s145 = sshll.u32 %s5, 4
      %s146 = int_to_ptr.hbm [resolvable:$true] %s145
      %148 = dma.vmem_to_hbm [thread:$0]  %s144, 16, %s146, [#allocation5]
    $region29: #{tpu_custom_call.1} parent=1 // pred_fallthru
      _
    // Predicated region
    $region30: #{tpu_custom_call.1} parent=1 // pred_check
      _
    $region31: #{tpu_custom_call.1} parent=1 // pred_check_branch
      %150 = sbr.rel (0) target = $region33
    $region32: #{tpu_custom_call.1} parent=1 // pred_region
      %152 = dma.done [#allocation5], 16
    $region33: #{tpu_custom_call.1} parent=1 // pred_fallthru
      _
    %153 = vsyncpa [#allocation4], 1
    %154 = vsyncpa [#allocation5], 1

</llo_original>
